<compile_context>
chip_gen: v7x
topology: tpu7x:2x2x1
jax: 0.10.0
libtpu: 0.0.40
codegen_flags: <defaults>
</compile_context>

<pallas_src>
import jax
import jax.numpy as jnp
from jax import lax
from jax.experimental import pallas as pl
from jax.experimental.pallas import tpu as pltpu


def _round_up(x, m):
    return (x + m - 1) // m * m


def _sublane_align(dtype):
    itemsize = jnp.dtype(dtype).itemsize
    return {1: 32, 2: 16}.get(itemsize, 8)


# ---------------------------------------------------------------------------
# Kernels
# ---------------------------------------------------------------------------
def _linear_kernel_single_k(x_ref, w_ref, b_ref, o_ref):
    """Whole K contraction fits in one tile: no accumulator round-trip."""
    # In-kernel activation cast (w_ref already holds the compute dtype).
    x = x_ref[...].astype(w_ref.dtype)
    acc = jnp.dot(x, w_ref[...], preferred_element_type=jnp.float32)
    o_ref[...] = (acc + b_ref[...]).astype(o_ref.dtype)


def _linear_kernel_multi_k(x_ref, w_ref, b_ref, o_ref, acc_ref):
    """K-tiled path: f32 VMEM accumulator, bias folded at k == 0."""
    k = pl.program_id(2)

    @pl.when(k == 0)
    def _init():
        acc_ref[...] = jnp.broadcast_to(b_ref[...], acc_ref.shape)

    acc_ref[...] += jnp.dot(x_ref[...].astype(w_ref.dtype), w_ref[...],
                            preferred_element_type=jnp.float32)

    @pl.when(k == pl.num_programs(2) - 1)
    def _finalize():
        o_ref[...] = acc_ref[...].astype(o_ref.dtype)


# ---------------------------------------------------------------------------
# Wrapper: one-time parameter prep + jitted forward
# ---------------------------------------------------------------------------
def make_img_rsz_linear(weight, bias, *, compute_dtype=jnp.bfloat16,
                        out_dtype=None, tm=512, tn=512, tk=1024):
    """Prepare parameters once; returns apply(x) computing x @ W^T + b.

    weight: (N, K) in PyTorch nn.Linear (out_features, in_features) layout.
    bias:   (N,)
    Pass compute_dtype=jnp.float32 for f32-exact nn.Linear behavior.
    """
    N, K = weight.shape
    assert bias.shape == (N,)

    # Lane-dim tiles: multiples of 128, clamped to the padded problem size.
    # Defaults are 256-multiples so full-size tiles fill the 256^2 MXU.
    tn = min(tn, _round_up(N, 128))
    tk = min(tk, _round_up(K, 128))
    Np = _round_up(N, tn)
    Kp = _round_up(K, tk)

    # One-time weight prep (parameter-load time, not per forward call):
    # transpose to (K, N) so the kernel contracts with no in-loop RHS
    # transpose, zero-pad to tile multiples, cast to the MXU compute dtype.
    wt = jnp.asarray(weight).T
    wt = jnp.pad(wt, ((0, Kp - K), (0, Np - N))).astype(compute_dtype)
    bp = jnp.pad(jnp.asarray(bias, jnp.float32), (0, Np - N)).reshape(1, Np)

    m_align = max(_sublane_align(compute_dtype), 8)

    @jax.jit
    def apply(x):
        B, K2 = x.shape
        assert K2 == K, "in_features mismatch"
        o_dtype = out_dtype if out_dtype is not None else x.dtype

        # Sublane tile clamp, packing-aware (16 rows for bf16 compute).
        tm_ = min(tm, _round_up(B, m_align))
        tn_ = tn

        # Guarantee >= 2 (i, j) "parallel" tiles when legally possible so
        # v7x's second TensorCore gets work.
        gi = pl.cdiv(B, tm_)
        while (gi * (Np // tn_) < 2 and tn_ >= 256
               and (tn_ // 2) % 128 == 0 and Np % (tn_ // 2) == 0):
            tn_ //= 2
        if gi * (Np // tn_) < 2 and tm_ >= 2 * m_align and B > tm_ // 2:
            tm_ //= 2

        Bp = _round_up(B, tm_)
        xp = x
        if (Bp, Kp) != (B, K):
            # Zero padding is harmless for a linear layer; x stays native
            # dtype (cast happens inside the kernel).
            xp = jnp.pad(x, ((0, Bp - B), (0, Kp - K)))

        grid_ij = (Bp // tm_, Np // tn_)
        n_k = Kp // tk
        x_item = jnp.dtype(x.dtype).itemsize
        w_item = jnp.dtype(compute_dtype).itemsize
        o_item = jnp.dtype(o_dtype).itemsize

        # VMEM budget: double-buffered inputs/output + f32 accumulator.
        vmem_est = (2 * (tm_ * tk * x_item + tk * tn_ * w_item
                         + 8 * tn_ * 4 + tm_ * tn_ * o_item)
                    + tm_ * tn_ * 4)
        vmem_limit = min(max(vmem_est + (8 << 20), 16 << 20), 48 << 20)

        cost = pl.CostEstimate(
            flops=2 * B * N * K,
            transcendentals=0,
            bytes_accessed=(B * K * x_item + K * N * w_item + N * 4
                            + B * N * o_item),
        )

        if n_k == 1:
            # Fast path: single K step -> write output directly, no scratch,
            # no accumulator init/finalize overhead.
            grid_spec = pltpu.PrefetchScalarGridSpec(
                num_scalar_prefetch=0,
                grid=grid_ij,
                in_specs=[
                    pl.BlockSpec((tm_, tk), lambda i, j: (i, 0)),   # x
                    pl.BlockSpec((tk, tn_), lambda i, j: (0, j)),   # W^T (K,N)
                    pl.BlockSpec((1, tn_), lambda i, j: (0, j)),    # bias
                ],
                out_specs=pl.BlockSpec((tm_, tn_), lambda i, j: (i, j)),
            )
            kernel = _linear_kernel_single_k
            semantics = ("parallel", "parallel")
        else:
            grid_spec = pltpu.PrefetchScalarGridSpec(
                num_scalar_prefetch=0,
                grid=grid_ij + (n_k,),
                in_specs=[
                    pl.BlockSpec((tm_, tk), lambda i, j, k: (i, k)),   # x
                    pl.BlockSpec((tk, tn_), lambda i, j, k: (k, j)),   # W^T
                    pl.BlockSpec((1, tn_), lambda i, j, k: (0, j)),    # bias
                ],
                out_specs=pl.BlockSpec((tm_, tn_), lambda i, j, k: (i, j)),
                scratch_shapes=[pltpu.VMEM((tm_, tn_), jnp.float32)],
            )
            kernel = _linear_kernel_multi_k
            semantics = ("parallel", "parallel", "arbitrary")

        yp = pl.pallas_call(
            kernel,
            out_shape=jax.ShapeDtypeStruct((Bp, Np), o_dtype),
            grid_spec=grid_spec,
            compiler_params=pltpu.CompilerParams(
                dimension_semantics=semantics,
                vmem_limit_bytes=vmem_limit,
            ),
            cost_estimate=cost,
        )(xp, wt, bp)

        return yp[:B, :N]

    return apply


def img_rsz_linear(x, weight, bias, **kwargs):
    """Convenience one-shot form (re-prepares the weight every call)."""
    return make_img_rsz_linear(weight, bias, **kwargs)(x)


if __name__ == "__main__":
    # Module hyper-parameters (small): from a 16x16 image to an 8x8 image.
    from_input_1, from_input_2 = 16, 16
    to_output_1, to_output_2 = 8, 8
    in_features = from_input_1 * from_input_2      # 256
    out_features = to_output_1 * to_output_2       # 64
    batch = 2

    key = jax.random.PRNGKey(0)
    kx, kw, kb, kx2, kw2, kb2 = jax.random.split(key, 6)

    # --- shipped module shape (single-K fast path) --------------------------
    x = jax.random.normal(kx, (batch, in_features), dtype=jnp.float32)
    w_std = (2.0 / (in_features + out_features)) ** 0.5   # xavier-normal scale
    weight = w_std * jax.random.normal(
        kw, (out_features, in_features), dtype=jnp.float32)
    bias = 0.01 * jax.random.normal(kb, (out_features,), dtype=jnp.float32)

    linear = make_img_rsz_linear(weight, bias)     # one-time weight prep
    y = jax.block_until_ready(linear(x))

    y_ref = jnp.dot(x, weight.T, precision=lax.Precision.HIGHEST) + bias
    assert y.shape == (batch, out_features)
    assert jnp.allclose(y, y_ref, atol=5e-2, rtol=5e-2), (
        float(jnp.max(jnp.abs(y - y_ref))))

    # --- larger shape exercising the K-tiled accumulator path ---------------
    B2, K2, N2 = 64, 2048, 512
    x2 = jax.random.normal(kx2, (B2, K2), dtype=jnp.float32)
    w2 = 0.02 * jax.random.normal(kw2, (N2, K2), dtype=jnp.float32)
    b2 = 0.01 * jax.random.normal(kb2, (N2,), dtype=jnp.float32)

    linear2 = make_img_rsz_linear(w2, b2)
    y2 = jax.block_until_ready(linear2(x2))
    y2_ref = jnp.dot(x2, w2.T, precision=lax.Precision.HIGHEST) + b2
    assert y2.shape == (B2, N2)
    assert jnp.allclose(y2, y2_ref, atol=5e-2, rtol=5e-2), (
        float(jnp.max(jnp.abs(y2 - y2_ref))))

    print("KERNEL_OK")
</pallas_src>

<mosaic_0001>
module attributes {stable_mosaic.version = 11 : i64} {
  func.func @_linear_kernel_single_k(%arg0: i32, %arg1: i32, %arg2: memref<16x256xf32, #tpu.memory_space<vmem>>, %arg3: memref<256x128xbf16, #tpu.memory_space<vmem>>, %arg4: memref<1x128xf32, #tpu.memory_space<vmem>>, %arg5: memref<16x128xf32, #tpu.memory_space<vmem>>) attributes {dimension_semantics = [#tpu.dimension_semantics<parallel>, #tpu.dimension_semantics<parallel>], iteration_bounds = array<i64: 1, 1>, scalar_prefetch = 0 : i64, scratch_operands = 0 : i64, tpu.core_type = #tpu.core_type<tc>, window_params = [{transform_indices = @transform_0, window_bounds = array<i64: 16, 256>}, {transform_indices = @transform_1, window_bounds = array<i64: 256, 128>}, {transform_indices = @transform_2, window_bounds = array<i64: 1, 128>}, {transform_indices = @transform_3, window_bounds = array<i64: 16, 128>}]} {
    %c0 = arith.constant 0 : index
    %c0_0 = arith.constant 0 : index
    %0 = vector.load %arg2[%c0, %c0_0] : memref<16x256xf32, #tpu.memory_space<vmem>>, vector<16x256xf32>
    %1 = arith.truncf %0 : vector<16x256xf32> to vector<16x256xbf16>
    %c0_1 = arith.constant 0 : index
    %c0_2 = arith.constant 0 : index
    %2 = vector.load %arg3[%c0_1, %c0_2] : memref<256x128xbf16, #tpu.memory_space<vmem>>, vector<256x128xbf16>
    %cst = arith.constant dense<0.000000e+00> : vector<16x128xf32>
    %3 = tpu.matmul %1, %2, %cst {dimension_numbers = #tpu.dot_dimension_numbers<[1], [0], [0], [1], [0, 0, 1, 1], [], []>} : vector<16x256xbf16>, vector<256x128xbf16>, vector<16x128xf32> -> vector<16x128xf32>
    %c0_3 = arith.constant 0 : index
    %c0_4 = arith.constant 0 : index
    %4 = vector.load %arg4[%c0_3, %c0_4] : memref<1x128xf32, #tpu.memory_space<vmem>>, vector<1x128xf32>
    %5 = vector.broadcast %4 : vector<1x128xf32> to vector<16x128xf32>
    %6 = arith.addf %3, %5 : vector<16x128xf32>
    %c0_5 = arith.constant 0 : index
    %c0_6 = arith.constant 0 : index
    %7 = vector.load %arg5[%c0_5, %c0_6] : memref<16x128xf32, #tpu.memory_space<vmem>>, vector<16x128xf32>
    tpu.vector_store %arg5[%c0_5, %c0_6], %6 {strides = array<i32>} : memref<16x128xf32, #tpu.memory_space<vmem>>, vector<16x128xf32>,
    return
  }
  func.func @transform_0(%arg0: i32, %arg1: i32) -> (i32, i32) {
    %c0_i32 = arith.constant 0 : i32
    %c0_i32_0 = arith.constant 0 : i32
    return %arg0, %c0_i32 : i32, i32
  }
  func.func @transform_1(%arg0: i32, %arg1: i32) -> (i32, i32) {
    %c0_i32 = arith.constant 0 : i32
    %c0_i32_0 = arith.constant 0 : i32
    return %c0_i32, %arg1 : i32, i32
  }
  func.func @transform_2(%arg0: i32, %arg1: i32) -> (i32, i32) {
    %c0_i32 = arith.constant 0 : i32
    %c0_i32_0 = arith.constant 0 : i32
    return %c0_i32, %arg1 : i32, i32
  }
  func.func @transform_3(%arg0: i32, %arg1: i32) -> (i32, i32) {
    %c0_i32 = arith.constant 0 : i32
    return %arg0, %arg1 : i32, i32
  }
}

</mosaic_0001>

<llo_original>
// kernel: apply.1
$region0: #{apply.1}
  #allocation0 [shape = 'u32[]', space=smem, size = 0x4, offset = 0x4, fixed_abs, tag = 'smem constant byte address 0x4 - core index']
  #allocation1 [shape = 'u32[144,128]{1,0:T(1,128)}', space=vmem, size = 0x12000, scoped, tag = 'internal scratch']
  %s0 = inlined_call_operand.vmem [shape: f32[16,256], index: 0, kind: input, shape index: {}]
  %s1 = inlined_call_operand.hbm [shape: bf16[256,128], index: 1, kind: input, shape index: {}]
  %s2 = inlined_call_operand.vmem [shape: f32[1,128], index: 2, kind: input, shape index: {}]
  %s3 = inlined_call_operand.vmem [shape: f32[16,128], index: 3, kind: output, shape index: {}]
  %s4 = sld [smem:[#allocation0]]
  $region26: #{apply.1} parent=0
    _
  %s6 = ssub.s32 1, %s4
  %s7 = scalar_select 0, %s6, %s4
  $region1: #{apply.1} parent=0
    #allocation2 [shape = 'u8[65536]{0}', space=vmem, size = 0x10000, scoped, tag = 'input window, operand 1, single buffered']
    #allocation3 [shape = 's32[1]{0}', space=sflag, size = 0x4, scoped, tag = 'scoped memory for apply.1']
    %8 = vsyncpa [#allocation3], 0
    // Predicated region
    $region2: #{apply.1} parent=1 // pred_check
      _
    $region3: #{apply.1} parent=1 // pred_check_branch
      %10 = sbr.rel (0) target = $region5
    $region4: #{apply.1} parent=1 // pred_region
      _
    $region5: #{apply.1} parent=1 // pred_fallthru
      _
    // Predicated region
    $region6: #{apply.1} parent=1 // pred_check
      _
    $region7: #{apply.1} parent=1 // pred_check_branch
      %12 = sbr.rel (0) target = $region9
    $region8: #{apply.1} parent=1 // pred_region
      %s14 = ssub.s32 2048, 2048
      %15 = vsyncadd [#allocation3], %s14
      %s16 = sshll.u32 [#allocation2], 4
      %s17 = int_to_ptr.vmem [resolvable:$true] %s16
      %22 = dma.hbm_to_vmem [thread:$0]  %s1, 2048, %s17, [#allocation3], 64, 64, 4
    $region9: #{apply.1} parent=1 // pred_fallthru
      _
    // Predicated region
    $region10: #{apply.1} parent=1 // pred_check
      _
    $region11: #{apply.1} parent=1 // pred_check_branch
      %24 = sbr.rel (0) target = $region13
    $region12: #{apply.1} parent=1 // pred_region
      _
    $region13: #{apply.1} parent=1 // pred_fallthru
      _
    // Predicated region
    $region14: #{apply.1} parent=1 // pred_check
      _
    $region15: #{apply.1} parent=1 // pred_check_branch
      %26 = sbr.rel (0) target = $region17
    $region16: #{apply.1} parent=1 // pred_region
      %27 = dma.done [#allocation3], 2048
    $region17: #{apply.1} parent=1 // pred_fallthru
      _
    %v29 = vld [vmem:[%s0] sm:$0xff]
    %v30 = vld [vmem:[%s0 + $0x8] sm:$0xff]
    %v31 = vld [vmem:[%s0 + $0x10] sm:$0xff]
    %v32 = vld [vmem:[%s0 + $0x18] sm:$0xff]
    %v33 = vpack.c.bf16 %v31, %v29
    %v34 = vpack.c.bf16 %v32, %v30
    %v35 = vld [vmem:[#allocation2] sm:$0xf]
    %v36 = vld [vmem:[#allocation2 + $0x4] sm:$0xf]
    %v37 = vld [vmem:[#allocation2 + $0x8] sm:$0xf]
    %v38 = vld [vmem:[#allocation2 + $0xc] sm:$0xf]
    %v39 = vld [vmem:[#allocation2 + $0x10] sm:$0xf]
    %v40 = vld [vmem:[#allocation2 + $0x14] sm:$0xf]
    %v41 = vld [vmem:[#allocation2 + $0x18] sm:$0xf]
    %v42 = vld [vmem:[#allocation2 + $0x1c] sm:$0xf]
    %v43 = vld [vmem:[#allocation2 + $0x20] sm:$0xf]
    %v44 = vld [vmem:[#allocation2 + $0x24] sm:$0xf]
    %v45 = vld [vmem:[#allocation2 + $0x28] sm:$0xf]
    %v46 = vld [vmem:[#allocation2 + $0x2c] sm:$0xf]
    %v47 = vld [vmem:[#allocation2 + $0x30] sm:$0xf]
    %v48 = vld [vmem:[#allocation2 + $0x34] sm:$0xf]
    %v49 = vld [vmem:[#allocation2 + $0x38] sm:$0xf]
    %v50 = vld [vmem:[#allocation2 + $0x3c] sm:$0xf]
    %v51 = vld [vmem:[#allocation2 + $0x40] sm:$0xf]
    %v52 = vld [vmem:[#allocation2 + $0x44] sm:$0xf]
    %v53 = vld [vmem:[#allocation2 + $0x48] sm:$0xf]
    %v54 = vld [vmem:[#allocation2 + $0x4c] sm:$0xf]
    %v55 = vld [vmem:[#allocation2 + $0x50] sm:$0xf]
    %v56 = vld [vmem:[#allocation2 + $0x54] sm:$0xf]
    %v57 = vld [vmem:[#allocation2 + $0x58] sm:$0xf]
    %v58 = vld [vmem:[#allocation2 + $0x5c] sm:$0xf]
    %v59 = vld [vmem:[#allocation2 + $0x60] sm:$0xf]
    %v60 = vld [vmem:[#allocation2 + $0x64] sm:$0xf]
    %v61 = vld [vmem:[#allocation2 + $0x68] sm:$0xf]
    %v62 = vld [vmem:[#allocation2 + $0x6c] sm:$0xf]
    %v63 = vld [vmem:[#allocation2 + $0x70] sm:$0xf]
    %v64 = vld [vmem:[#allocation2 + $0x74] sm:$0xf]
    %v65 = vld [vmem:[#allocation2 + $0x78] sm:$0xf]
    %v66 = vld [vmem:[#allocation2 + $0x7c] sm:$0xf]
    %v67 = vld [vmem:[%s2] sm:$0x1]
    %v69 = vlaneseq
    %v70 = vshrl.u32 %v69, 7
    %v71 = vsub.s32 0, %v70
    %v72 = vrot.slane %v67, %v71
    %v106 = vunpack.c.l.b16 %v35
    %v107 = vunpack.c.l.b16 %v36
    %v108 = vunpack.c.l.b16 %v37
    %v109 = vunpack.c.l.b16 %v38
    %v110 = vunpack.c.l.b16 %v39
    %v111 = vunpack.c.l.b16 %v40
    %v112 = vunpack.c.l.b16 %v41
    %v113 = vunpack.c.l.b16 %v42
    %v114 = vunpack.c.l.b16 %v43
    %v115 = vunpack.c.l.b16 %v44
    %v116 = vunpack.c.l.b16 %v45
    %v117 = vunpack.c.l.b16 %v46
    %v118 = vunpack.c.l.b16 %v47
    %v119 = vunpack.c.l.b16 %v48
    %v120 = vunpack.c.l.b16 %v49
    %v121 = vunpack.c.l.b16 %v50
    %v122 = vunpack.c.l.b16 %v51
    %v123 = vunpack.c.l.b16 %v52
    %v124 = vunpack.c.l.b16 %v53
    %v125 = vunpack.c.l.b16 %v54
    %v126 = vunpack.c.l.b16 %v55
    %v127 = vunpack.c.l.b16 %v56
    %v128 = vunpack.c.l.b16 %v57
    %v129 = vunpack.c.l.b16 %v58
    %v130 = vunpack.c.l.b16 %v59
    %v131 = vunpack.c.l.b16 %v60
    %v132 = vunpack.c.l.b16 %v61
    %v133 = vunpack.c.l.b16 %v62
    %v134 = vunpack.c.l.b16 %v63
    %v135 = vunpack.c.l.b16 %v64
    %v136 = vunpack.c.l.b16 %v65
    %v137 = vunpack.c.l.b16 %v66
    %v138 = vpack.c.b16 %v107, %v106
    %v139 = vpack.c.b16 %v109, %v108
    %v140 = vpack.c.b16 %v111, %v110
    %v141 = vpack.c.b16 %v113, %v112
    %v142 = vpack.c.b16 %v115, %v114
    %v143 = vpack.c.b16 %v117, %v116
    %v144 = vpack.c.b16 %v119, %v118
    %v145 = vpack.c.b16 %v121, %v120
    %v146 = vpack.c.b16 %v123, %v122
    %v147 = vpack.c.b16 %v125, %v124
    %v148 = vpack.c.b16 %v127, %v126
    %v149 = vpack.c.b16 %v129, %v128
    %v150 = vpack.c.b16 %v131, %v130
    %v151 = vpack.c.b16 %v133, %v132
    %v152 = vpack.c.b16 %v135, %v134
    %v153 = vpack.c.b16 %v137, %v136
    %170 = vmatprep.subr.bf16.mxu0 0
    %171 = vmatpush1.bf16.msra.mxu0 %v138
    %172 = vmatprep.subr.bf16.mxu0 0
    %173 = vmatpush1.bf16.msra.mxu0 %v139
    %174 = vmatprep.subr.bf16.mxu0 0
    %175 = vmatpush1.bf16.msra.mxu0 %v140
    %176 = vmatprep.subr.bf16.mxu0 0
    %177 = vmatpush1.bf16.msra.mxu0 %v141
    %178 = vmatprep.subr.bf16.mxu0 0
    %179 = vmatpush1.bf16.msra.mxu0 %v142
    %180 = vmatprep.subr.bf16.mxu0 0
    %181 = vmatpush1.bf16.msra.mxu0 %v143
    %182 = vmatprep.subr.bf16.mxu0 0
    %183 = vmatpush1.bf16.msra.mxu0 %v144
    %184 = vmatprep.subr.bf16.mxu0 0
    %185 = vmatpush1.bf16.msra.mxu0 %v145
    %186 = vmatprep.subr.bf16.mxu0 0
    %187 = vmatpush1.bf16.msra.mxu0 %v146
    %188 = vmatprep.subr.bf16.mxu0 0
    %189 = vmatpush1.bf16.msra.mxu0 %v147
    %190 = vmatprep.subr.bf16.mxu0 0
    %191 = vmatpush1.bf16.msra.mxu0 %v148
    %192 = vmatprep.subr.bf16.mxu0 0
    %193 = vmatpush1.bf16.msra.mxu0 %v149
    %194 = vmatprep.subr.bf16.mxu0 0
    %195 = vmatpush1.bf16.msra.mxu0 %v150
    %196 = vmatprep.subr.bf16.mxu0 0
    %197 = vmatpush1.bf16.msra.mxu0 %v151
    %198 = vmatprep.subr.bf16.mxu0 0
    %199 = vmatpush1.bf16.msra.mxu0 %v152
    %200 = vmatprep.subr.bf16.mxu0 0
    %201 = vmatpush1.bf16.msra.mxu0 %v153
    %202 = vmatprep.mubr.bf16.mxu0 %v34
    %203 = vmatmul.mubr.bf16.gmra.mrb[0].mxu0 %v33
    %v204 = vpop.f32.mrb[0].mxu0
    %v205 = vadd.f32 %v72, %v204
    %v206 = vpop.f32.mrb[0].mxu0
    %v207 = vpop.f32.mrb[0].mxu0
    %v208 = vadd.f32 %v72, %v207
    %v209 = vpop.f32.mrb[0].mxu0
    %210 = vdwg.mxu0
    %211 = vst [vmem:[%s3] sm:$0xff] %v205
    %212 = vst [vmem:[%s3 + $0x8] sm:$0xff] %v208
    // Predicated region
    $region18: #{apply.1} parent=1 // pred_check
      _
    $region19: #{apply.1} parent=1 // pred_check_branch
      %214 = sbr.rel (0) target = $region21
    $region20: #{apply.1} parent=1 // pred_region
      _
    $region21: #{apply.1} parent=1 // pred_fallthru
      _
    // Predicated region
    $region22: #{apply.1} parent=1 // pred_check
      _
    $region23: #{apply.1} parent=1 // pred_check_branch
      %216 = sbr.rel (0) target = $region25
    $region24: #{apply.1} parent=1 // pred_region
      _
    $region25: #{apply.1} parent=1 // pred_fallthru
      _
    %217 = vsyncpa [#allocation3], 1

</llo_original>
